<compile_context>
chip_gen: v7x
topology: tpu7x:2x2x1
jax: 0.10.0
libtpu: 0.0.40
codegen_flags: <defaults>
</compile_context>

<pallas_src>
import math

import jax
import jax.numpy as jnp
from jax.experimental import pallas as pl
from jax.experimental.pallas import tpu as pltpu

PACK = 4  # batch rows packed per lane group: 4 * 32 hidden = 128 lanes
H1, H2, H3 = 32, 64, 32


def _round_up(n, m):
    return ((n + m - 1) // m) * m


def _cdiv(a, b):
    return -(-a // b)


def _mlp_kernel(x_ref,
                w1_ref, b1_ref,
                w2_ref, b2_ref,
                w3_ref, b3_ref,
                w4_ref, b4_ref,
                o_ref):
    """Fused 4-layer MLP forward for one (packed) batch tile; all in VMEM."""
    x = x_ref[...].astype(jnp.float32)  # mirrors `x = x.float()` in PyTorch

    h = jnp.tanh(
        jnp.dot(x, w1_ref[...], preferred_element_type=jnp.float32) + b1_ref[...])
    h = jnp.tanh(
        jnp.dot(h, w2_ref[...], preferred_element_type=jnp.float32) + b2_ref[...])
    h = jnp.tanh(
        jnp.dot(h, w3_ref[...], preferred_element_type=jnp.float32) + b3_ref[...])
    out = jnp.dot(h, w4_ref[...], preferred_element_type=jnp.float32) + b4_ref[...]

    o_ref[...] = out.astype(o_ref.dtype)


def _pack_params(params, out_pad):
    """Block-diagonal (kron) packing of the 4 layers for PACK rows per lane
    group. The output layer is zero-padded to `out_pad` columns per block so
    the packed output width is lane-dense (PACK * out_pad % 128 == 0)."""
    w1, b1, w2, b2, w3, b3, w4, b4 = params

    def bd(w):  # (fi, fo) -> (PACK*fi, PACK*fo), block diagonal
        return jnp.kron(jnp.eye(PACK, dtype=w.dtype), w)

    def tb(b):  # (1, fo) -> (1, PACK*fo)
        return jnp.tile(b, (1, PACK))

    w4p = jnp.pad(w4, ((0, 0), (0, out_pad - w4.shape[1])))  # zero cols: exact
    b4p = jnp.pad(b4, ((0, 0), (0, out_pad - b4.shape[1])))
    return (bd(w1), tb(b1), bd(w2), tb(b2), bd(w3), tb(b3), bd(w4p), tb(b4p))


def mlp_forward(x, params, *, tb_max=2048):
    """params = (w1, b1, w2, b2, w3, b3, w4, b4); weights are (in, out),
    biases are (1, out). Returns (B, out_size) float32."""
    B, in_size = x.shape
    out_size = params[-1].shape[-1]
    out_pad = _round_up(max(out_size, 32), 32)   # PACK*out_pad multiple of 128

    packed = _pack_params(params, out_pad)
    k1 = PACK * in_size
    n1, n2, n3, n4 = PACK * H1, PACK * H2, PACK * H3, PACK * out_pad

    # --- batch tiling in the packed (4-rows-per-row) domain -----------------
    bp = _cdiv(B, PACK)                      # packed rows of real data
    bp8 = _round_up(max(bp, 8), 8)           # sublane-aligned packed rows

    num_tiles = _cdiv(bp8, tb_max)
    if bp8 > 8:                              # enough work for >= 2 tiles
        num_tiles = max(num_tiles, 2)        # keep both v7x cores busy
        num_tiles += num_tiles % 2           # even count -> balanced split
    tb = _round_up(_cdiv(bp8, num_tiles), 8)  # packed-row tile, mult of 8
    bp_pad = num_tiles * tb                  # waste <= 8 packed rows per tile
    b_pad = bp_pad * PACK

    if b_pad != B:
        x = jnp.pad(x, ((0, b_pad - B), (0, 0)))
    xp = x.reshape(bp_pad, k1)               # contiguous, lane-dense LHS

    grid = (num_tiles,)
    x_spec = pl.BlockSpec((tb, k1), lambda i: (i, 0))
    out_spec = pl.BlockSpec((tb, n4), lambda i: (i, 0))
    # Full-shape blocks with constant index_maps: weights/biases stay
    # VMEM-resident across all grid steps (no per-step re-DMA).
    param_specs = [pl.BlockSpec(p.shape, lambda i: (0, 0)) for p in packed]

    flops = 2 * bp_pad * (k1 * n1 + n1 * n2 + n2 * n3 + n3 * n4)
    transcendentals = bp_pad * (n1 + n2 + n3)
    bytes_accessed = 4 * (bp_pad * (k1 + n4)
                          + sum(int(p.size) for p in packed))

    out = pl.pallas_call(
        _mlp_kernel,
        out_shape=jax.ShapeDtypeStruct((bp_pad, n4), jnp.float32),
        grid=grid,
        in_specs=[x_spec] + param_specs,
        out_specs=out_spec,
        compiler_params=pltpu.CompilerParams(
            dimension_semantics=("parallel",)),
        cost_estimate=pl.CostEstimate(
            flops=flops,
            transcendentals=transcendentals,
            bytes_accessed=bytes_accessed),
    )(xp, *packed)

    # (bp_pad, PACK*out_pad) -> (b_pad, out_pad) -> real rows / cols.
    out = out.reshape(b_pad, out_pad)
    return out[:B, :out_size]


def _xavier_uniform(key, fan_in, fan_out):
    # Matches torch.nn.init.xavier_uniform_ (gain=1); stored as (in, out).
    bound = math.sqrt(6.0 / (fan_in + fan_out))
    return jax.random.uniform(key, (fan_in, fan_out), jnp.float32, -bound, bound)


def _linear_bias(key, fan_in, fan_out):
    # Matches torch.nn.Linear default bias init: U(-1/sqrt(fan_in), 1/sqrt(fan_in)).
    bound = 1.0 / math.sqrt(fan_in)
    return jax.random.uniform(key, (1, fan_out), jnp.float32, -bound, bound)


def init_params(key, in_size, out_size):
    dims = [(in_size, H1), (H1, H2), (H2, H3), (H3, out_size)]
    keys = jax.random.split(key, 2 * len(dims))
    params = []
    for i, (fi, fo) in enumerate(dims):
        params.append(_xavier_uniform(keys[2 * i], fi, fo))
        params.append(_linear_bias(keys[2 * i + 1], fi, fo))
    return tuple(params)


def reference_forward(x, params):
    w1, b1, w2, b2, w3, b3, w4, b4 = params
    h = jnp.tanh(x.astype(jnp.float32) @ w1 + b1)
    h = jnp.tanh(h @ w2 + b2)
    h = jnp.tanh(h @ w3 + b3)
    return h @ w4 + b4


if __name__ == "__main__":
    in_size, out_size = 4, 2

    key = jax.random.PRNGKey(0)
    pkey, xkey1, xkey2 = jax.random.split(key, 3)
    params = init_params(pkey, in_size, out_size)

    # Case 1: small, sublane-aligned batch (single tile).
    x1 = jax.random.normal(xkey1, (8, in_size), jnp.float32)
    out1 = jax.block_until_ready(mlp_forward(x1, params))
    ref1 = reference_forward(x1, params)
    assert out1.shape == (8, out_size)
    assert jnp.allclose(out1, ref1, atol=1e-5, rtol=1e-5), "mismatch (B=8)"

    # Case 2: batch not a multiple of 4/8 -> exercises padding + 2-tile grid.
    x2 = jax.random.normal(xkey2, (37, in_size), jnp.float32)
    out2 = jax.block_until_ready(mlp_forward(x2, params))
    ref2 = reference_forward(x2, params)
    assert out2.shape == (37, out_size)
    assert jnp.allclose(out2, ref2, atol=1e-5, rtol=1e-5), "mismatch (B=37)"

    print("KERNEL_OK")
</pallas_src>

<mosaic_0001>
module attributes {stable_mosaic.version = 11 : i64} {
  func.func @_mlp_kernel(%arg0: i32, %arg1: memref<8x16xf32, #tpu.memory_space<vmem>>, %arg2: memref<16x128xf32, #tpu.memory_space<vmem>>, %arg3: memref<1x128xf32, #tpu.memory_space<vmem>>, %arg4: memref<128x256xf32, #tpu.memory_space<vmem>>, %arg5: memref<1x256xf32, #tpu.memory_space<vmem>>, %arg6: memref<256x128xf32, #tpu.memory_space<vmem>>, %arg7: memref<1x128xf32, #tpu.memory_space<vmem>>, %arg8: memref<128x128xf32, #tpu.memory_space<vmem>>, %arg9: memref<1x128xf32, #tpu.memory_space<vmem>>, %arg10: memref<8x128xf32, #tpu.memory_space<vmem>>) attributes {dimension_semantics = [#tpu.dimension_semantics<parallel>], iteration_bounds = array<i64: 1>, scalar_prefetch = 0 : i64, scratch_operands = 0 : i64, tpu.core_type = #tpu.core_type<tc>, window_params = [{transform_indices = @transform_0, window_bounds = array<i64: 8, 16>}, {pipeline_mode = #tpu.pipeline_mode<synchronous>, transform_indices = @transform_1, window_bounds = array<i64: 16, 128>}, {pipeline_mode = #tpu.pipeline_mode<synchronous>, transform_indices = @transform_2, window_bounds = array<i64: 1, 128>}, {pipeline_mode = #tpu.pipeline_mode<synchronous>, transform_indices = @transform_3, window_bounds = array<i64: 128, 256>}, {pipeline_mode = #tpu.pipeline_mode<synchronous>, transform_indices = @transform_4, window_bounds = array<i64: 1, 256>}, {pipeline_mode = #tpu.pipeline_mode<synchronous>, transform_indices = @transform_5, window_bounds = array<i64: 256, 128>}, {pipeline_mode = #tpu.pipeline_mode<synchronous>, transform_indices = @transform_6, window_bounds = array<i64: 1, 128>}, {pipeline_mode = #tpu.pipeline_mode<synchronous>, transform_indices = @transform_7, window_bounds = array<i64: 128, 128>}, {pipeline_mode = #tpu.pipeline_mode<synchronous>, transform_indices = @transform_8, window_bounds = array<i64: 1, 128>}, {transform_indices = @transform_9, window_bounds = array<i64: 8, 128>}]} {
    %c0 = arith.constant 0 : index
    %c0_0 = arith.constant 0 : index
    %0 = vector.load %arg1[%c0, %c0_0] : memref<8x16xf32, #tpu.memory_space<vmem>>, vector<8x16xf32>
    %c0_1 = arith.constant 0 : index
    %c0_2 = arith.constant 0 : index
    %1 = vector.load %arg2[%c0_1, %c0_2] : memref<16x128xf32, #tpu.memory_space<vmem>>, vector<16x128xf32>
    %cst = arith.constant dense<0.000000e+00> : vector<8x128xf32>
    %2 = tpu.matmul %0, %1, %cst {dimension_numbers = #tpu.dot_dimension_numbers<[1], [0], [0], [1], [0, 0, 1, 1], [], []>} : vector<8x16xf32>, vector<16x128xf32>, vector<8x128xf32> -> vector<8x128xf32>
    %c0_3 = arith.constant 0 : index
    %c0_4 = arith.constant 0 : index
    %3 = vector.load %arg3[%c0_3, %c0_4] : memref<1x128xf32, #tpu.memory_space<vmem>>, vector<1x128xf32>
    %4 = vector.broadcast %3 : vector<1x128xf32> to vector<8x128xf32>
    %5 = arith.addf %2, %4 : vector<8x128xf32>
    %6 = math.tanh %5 : vector<8x128xf32>
    %c0_5 = arith.constant 0 : index
    %c0_6 = arith.constant 0 : index
    %7 = vector.load %arg4[%c0_5, %c0_6] : memref<128x256xf32, #tpu.memory_space<vmem>>, vector<128x256xf32>
    %cst_7 = arith.constant dense<0.000000e+00> : vector<8x256xf32>
    %8 = tpu.matmul %6, %7, %cst_7 {dimension_numbers = #tpu.dot_dimension_numbers<[1], [0], [0], [1], [0, 0, 1, 1], [], []>} : vector<8x128xf32>, vector<128x256xf32>, vector<8x256xf32> -> vector<8x256xf32>
    %c0_8 = arith.constant 0 : index
    %c0_9 = arith.constant 0 : index
    %9 = vector.load %arg5[%c0_8, %c0_9] : memref<1x256xf32, #tpu.memory_space<vmem>>, vector<1x256xf32>
    %10 = vector.broadcast %9 : vector<1x256xf32> to vector<8x256xf32>
    %11 = arith.addf %8, %10 : vector<8x256xf32>
    %12 = math.tanh %11 : vector<8x256xf32>
    %c0_10 = arith.constant 0 : index
    %c0_11 = arith.constant 0 : index
    %13 = vector.load %arg6[%c0_10, %c0_11] : memref<256x128xf32, #tpu.memory_space<vmem>>, vector<256x128xf32>
    %cst_12 = arith.constant dense<0.000000e+00> : vector<8x128xf32>
    %14 = tpu.matmul %12, %13, %cst_12 {dimension_numbers = #tpu.dot_dimension_numbers<[1], [0], [0], [1], [0, 0, 1, 1], [], []>} : vector<8x256xf32>, vector<256x128xf32>, vector<8x128xf32> -> vector<8x128xf32>
    %c0_13 = arith.constant 0 : index
    %c0_14 = arith.constant 0 : index
    %15 = vector.load %arg7[%c0_13, %c0_14] : memref<1x128xf32, #tpu.memory_space<vmem>>, vector<1x128xf32>
    %16 = vector.broadcast %15 : vector<1x128xf32> to vector<8x128xf32>
    %17 = arith.addf %14, %16 : vector<8x128xf32>
    %18 = math.tanh %17 : vector<8x128xf32>
    %c0_15 = arith.constant 0 : index
    %c0_16 = arith.constant 0 : index
    %19 = vector.load %arg8[%c0_15, %c0_16] : memref<128x128xf32, #tpu.memory_space<vmem>>, vector<128x128xf32>
    %cst_17 = arith.constant dense<0.000000e+00> : vector<8x128xf32>
    %20 = tpu.matmul %18, %19, %cst_17 {dimension_numbers = #tpu.dot_dimension_numbers<[1], [0], [0], [1], [0, 0, 1, 1], [], []>} : vector<8x128xf32>, vector<128x128xf32>, vector<8x128xf32> -> vector<8x128xf32>
    %c0_18 = arith.constant 0 : index
    %c0_19 = arith.constant 0 : index
    %21 = vector.load %arg9[%c0_18, %c0_19] : memref<1x128xf32, #tpu.memory_space<vmem>>, vector<1x128xf32>
    %22 = vector.broadcast %21 : vector<1x128xf32> to vector<8x128xf32>
    %23 = arith.addf %20, %22 : vector<8x128xf32>
    %c0_20 = arith.constant 0 : index
    %c0_21 = arith.constant 0 : index
    %24 = vector.load %arg10[%c0_20, %c0_21] : memref<8x128xf32, #tpu.memory_space<vmem>>, vector<8x128xf32>
    tpu.vector_store %arg10[%c0_20, %c0_21], %23 {strides = array<i32>} : memref<8x128xf32, #tpu.memory_space<vmem>>, vector<8x128xf32>,
    return
  }
  func.func @transform_0(%arg0: i32) -> (i32, i32) {
    %c0_i32 = arith.constant 0 : i32
    %c0_i32_0 = arith.constant 0 : i32
    return %arg0, %c0_i32 : i32, i32
  }
  func.func @transform_1(%arg0: i32) -> (i32, i32) {
    %c0_i32 = arith.constant 0 : i32
    %c0_i32_0 = arith.constant 0 : i32
    %c0_i32_1 = arith.constant 0 : i32
    return %c0_i32, %c0_i32_0 : i32, i32
  }
  func.func @transform_2(%arg0: i32) -> (i32, i32) {
    %c0_i32 = arith.constant 0 : i32
    %c0_i32_0 = arith.constant 0 : i32
    %c0_i32_1 = arith.constant 0 : i32
    return %c0_i32, %c0_i32_0 : i32, i32
  }
  func.func @transform_3(%arg0: i32) -> (i32, i32) {
    %c0_i32 = arith.constant 0 : i32
    %c0_i32_0 = arith.constant 0 : i32
    %c0_i32_1 = arith.constant 0 : i32
    return %c0_i32, %c0_i32_0 : i32, i32
  }
  func.func @transform_4(%arg0: i32) -> (i32, i32) {
    %c0_i32 = arith.constant 0 : i32
    %c0_i32_0 = arith.constant 0 : i32
    %c0_i32_1 = arith.constant 0 : i32
    return %c0_i32, %c0_i32_0 : i32, i32
  }
  func.func @transform_5(%arg0: i32) -> (i32, i32) {
    %c0_i32 = arith.constant 0 : i32
    %c0_i32_0 = arith.constant 0 : i32
    %c0_i32_1 = arith.constant 0 : i32
    return %c0_i32, %c0_i32_0 : i32, i32
  }
  func.func @transform_6(%arg0: i32) -> (i32, i32) {
    %c0_i32 = arith.constant 0 : i32
    %c0_i32_0 = arith.constant 0 : i32
    %c0_i32_1 = arith.constant 0 : i32
    return %c0_i32, %c0_i32_0 : i32, i32
  }
  func.func @transform_7(%arg0: i32) -> (i32, i32) {
    %c0_i32 = arith.constant 0 : i32
    %c0_i32_0 = arith.constant 0 : i32
    %c0_i32_1 = arith.constant 0 : i32
    return %c0_i32, %c0_i32_0 : i32, i32
  }
  func.func @transform_8(%arg0: i32) -> (i32, i32) {
    %c0_i32 = arith.constant 0 : i32
    %c0_i32_0 = arith.constant 0 : i32
    %c0_i32_1 = arith.constant 0 : i32
    return %c0_i32, %c0_i32_0 : i32, i32
  }
  func.func @transform_9(%arg0: i32) -> (i32, i32) {
    %c0_i32 = arith.constant 0 : i32
    %c0_i32_0 = arith.constant 0 : i32
    return %arg0, %c0_i32 : i32, i32
  }
}

</mosaic_0001>

<llo_original>
// kernel: tpu_custom_call.1
$region0: #{tpu_custom_call.1}
  #allocation0 [shape = 'u32[]', space=smem, size = 0x4, offset = 0x4, fixed_abs, tag = 'smem constant byte address 0x4 - core index']
  #allocation1 [shape = 'u32[144,128]{1,0:T(1,128)}', space=vmem, size = 0x12000, scoped, tag = 'internal scratch']
  %s0 = inlined_call_operand.hbm [shape: f32[8,16], index: 0, kind: input, shape index: {}]
  %s1 = inlined_call_operand.hbm [shape: f32[16,128], index: 1, kind: input, shape index: {}]
  %s2 = inlined_call_operand.vmem [shape: f32[1,128], index: 2, kind: input, shape index: {}]
  %s3 = inlined_call_operand.hbm [shape: f32[128,256], index: 3, kind: input, shape index: {}]
  %s4 = inlined_call_operand.vmem [shape: f32[1,256], index: 4, kind: input, shape index: {}]
  %s5 = inlined_call_operand.hbm [shape: f32[256,128], index: 5, kind: input, shape index: {}]
  %s6 = inlined_call_operand.vmem [shape: f32[1,128], index: 6, kind: input, shape index: {}]
  %s7 = inlined_call_operand.hbm [shape: f32[128,128], index: 7, kind: input, shape index: {}]
  %s8 = inlined_call_operand.vmem [shape: f32[1,128], index: 8, kind: input, shape index: {}]
  %s9 = inlined_call_operand.hbm [shape: f32[8,128], index: 9, kind: output, shape index: {}]
  %s10 = sld [smem:[#allocation0]]
  $region66: #{tpu_custom_call.1} parent=0
    _
  %s12 = ssub.s32 1, %s10
  %s13 = scalar_select 0, %s12, %s10
  $region1: #{tpu_custom_call.1} parent=0
    #allocation2 [shape = 'u8[4096]{0}', space=vmem, size = 0x1000, scoped, tag = 'input window, operand 0, single buffered']
    #allocation3 [shape = 's32[1]{0}', space=sflag, size = 0x4, scoped, tag = 'scoped memory for tpu_custom_call.1']
    #allocation4 [shape = 's32[1]{0}', space=sflag, size = 0x4, scoped, tag = 'scoped memory for tpu_custom_call.1']
    #allocation5 [shape = 'u8[8192]{0}', space=vmem, size = 0x2000, scoped, tag = 'input window, operand 1, single buffered']
    #allocation6 [shape = 's32[1]{0}', space=sflag, size = 0x4, scoped, tag = 'scoped memory for tpu_custom_call.1']
    #allocation7 [shape = 'u8[131072]{0}', space=vmem, size = 0x20000, scoped, tag = 'input window, operand 3, single buffered']
    #allocation8 [shape = 'u8[131072]{0}', space=vmem, size = 0x20000, scoped, tag = 'input window, operand 5, single buffered']
    #allocation9 [shape = 's32[1]{0}', space=sflag, size = 0x4, scoped, tag = 'scoped memory for tpu_custom_call.1']
    #allocation10 [shape = 'u8[65536]{0}', space=vmem, size = 0x10000, scoped, tag = 'input window, operand 7, single buffered']
    #allocation11 [shape = 'u8[4096]{0}', space=vmem, size = 0x1000, scoped, tag = 'output window, operand 0, single buffered']
    %14 = vsyncpa [#allocation3], 0
    %15 = vsyncpa [#allocation6], 0
    %16 = vsyncpa [#allocation9], 0
    %17 = vsyncpa [#allocation4], 0
    // Predicated region
    $region2: #{tpu_custom_call.1} parent=1 // pred_check
      _
    $region3: #{tpu_custom_call.1} parent=1 // pred_check_branch
      %19 = sbr.rel (0) target = $region5
    $region4: #{tpu_custom_call.1} parent=1 // pred_region
      %s21 = ssub.s32 128, 128
      %22 = vsyncadd [#allocation3], %s21
      %s24 = sshll.u32 [#allocation2], 4
      %s25 = int_to_ptr.vmem [resolvable:$true] %s24
      %27 = dma.hbm_to_vmem [thread:$0]  %s0, 128, %s25, [#allocation3]
    $region5: #{tpu_custom_call.1} parent=1 // pred_fallthru
      _
    // Predicated region
    $region6: #{tpu_custom_call.1} parent=1 // pred_check
      _
    $region7: #{tpu_custom_call.1} parent=1 // pred_check_branch
      %29 = sbr.rel (0) target = $region9
    $region8: #{tpu_custom_call.1} parent=1 // pred_region
      %s31 = ssub.s32 256, 256
      %32 = vsyncadd [#allocation6], %s31
      %s33 = sshll.u32 [#allocation5], 4
      %s34 = int_to_ptr.vmem [resolvable:$true] %s33
      %39 = dma.hbm_to_vmem [thread:$0]  %s1, 256, %s34, [#allocation6], 128, 128, 8
    $region9: #{tpu_custom_call.1} parent=1 // pred_fallthru
      _
    // Predicated region
    $region10: #{tpu_custom_call.1} parent=1 // pred_check
      _
    $region11: #{tpu_custom_call.1} parent=1 // pred_check_branch
      %41 = sbr.rel (0) target = $region13
    $region12: #{tpu_custom_call.1} parent=1 // pred_region
      _
    $region13: #{tpu_custom_call.1} parent=1 // pred_fallthru
      _
    // Predicated region
    $region14: #{tpu_custom_call.1} parent=1 // pred_check
      _
    $region15: #{tpu_custom_call.1} parent=1 // pred_check_branch
      %43 = sbr.rel (0) target = $region17
    $region16: #{tpu_custom_call.1} parent=1 // pred_region
      %s45 = ssub.s32 4096, 4096
      %46 = vsyncadd [#allocation6], %s45
      %s47 = sshll.u32 [#allocation7], 4
      %s48 = int_to_ptr.vmem [resolvable:$true] %s47
      %53 = dma.hbm_to_vmem [thread:$0]  %s3, 4096, %s48, [#allocation6], 256, 256, 16
    $region17: #{tpu_custom_call.1} parent=1 // pred_fallthru
      _
    // Predicated region
    $region18: #{tpu_custom_call.1} parent=1 // pred_check
      _
    $region19: #{tpu_custom_call.1} parent=1 // pred_check_branch
      %55 = sbr.rel (0) target = $region21
    $region20: #{tpu_custom_call.1} parent=1 // pred_region
      _
    $region21: #{tpu_custom_call.1} parent=1 // pred_fallthru
      _
    // Predicated region
    $region22: #{tpu_custom_call.1} parent=1 // pred_check
      _
    $region23: #{tpu_custom_call.1} parent=1 // pred_check_branch
      %57 = sbr.rel (0) target = $region25
    $region24: #{tpu_custom_call.1} parent=1 // pred_region
      %s59 = ssub.s32 4096, 4096
      %60 = vsyncadd [#allocation9], %s59
      %s61 = sshll.u32 [#allocation8], 4
      %s62 = int_to_ptr.vmem [resolvable:$true] %s61
      %67 = dma.hbm_to_vmem [thread:$0]  %s5, 4096, %s62, [#allocation9], 128, 128, 8
    $region25: #{tpu_custom_call.1} parent=1 // pred_fallthru
      _
    // Predicated region
    $region26: #{tpu_custom_call.1} parent=1 // pred_check
      _
    $region27: #{tpu_custom_call.1} parent=1 // pred_check_branch
      %69 = sbr.rel (0) target = $region29
    $region28: #{tpu_custom_call.1} parent=1 // pred_region
      _
    $region29: #{tpu_custom_call.1} parent=1 // pred_fallthru
      _
    // Predicated region
    $region30: #{tpu_custom_call.1} parent=1 // pred_check
      _
    $region31: #{tpu_custom_call.1} parent=1 // pred_check_branch
      %71 = sbr.rel (0) target = $region33
    $region32: #{tpu_custom_call.1} parent=1 // pred_region
      %s73 = ssub.s32 2048, 2048
      %74 = vsyncadd [#allocation9], %s73
      %s75 = sshll.u32 [#allocation10], 4
      %s76 = int_to_ptr.vmem [resolvable:$true] %s75
      %81 = dma.hbm_to_vmem [thread:$0]  %s7, 2048, %s76, [#allocation9], 128, 128, 8
    $region33: #{tpu_custom_call.1} parent=1 // pred_fallthru
      _
    // Predicated region
    $region34: #{tpu_custom_call.1} parent=1 // pred_check
      _
    $region35: #{tpu_custom_call.1} parent=1 // pred_check_branch
      %83 = sbr.rel (0) target = $region37
    $region36: #{tpu_custom_call.1} parent=1 // pred_region
      _
    $region37: #{tpu_custom_call.1} parent=1 // pred_fallthru
      _
    // Predicated region
    $region38: #{tpu_custom_call.1} parent=1 // pred_check
      _
    $region39: #{tpu_custom_call.1} parent=1 // pred_check_branch
      %85 = sbr.rel (0) target = $region41
    $region40: #{tpu_custom_call.1} parent=1 // pred_region
      %86 = dma.done [#allocation3], 128
    $region41: #{tpu_custom_call.1} parent=1 // pred_fallthru
      _
    // Predicated region
    $region42: #{tpu_custom_call.1} parent=1 // pred_check
      _
    $region43: #{tpu_custom_call.1} parent=1 // pred_check_branch
      %88 = sbr.rel (0) target = $region45
    $region44: #{tpu_custom_call.1} parent=1 // pred_region
      %89 = dma.done [#allocation6], 256
    $region45: #{tpu_custom_call.1} parent=1 // pred_fallthru
      _
    // Predicated region
    $region46: #{tpu_custom_call.1} parent=1 // pred_check
      _
    $region47: #{tpu_custom_call.1} parent=1 // pred_check_branch
      %91 = sbr.rel (0) target = $region49
    $region48: #{tpu_custom_call.1} parent=1 // pred_region
      %92 = dma.done [#allocation6], 4096
    $region49: #{tpu_custom_call.1} parent=1 // pred_fallthru
      _
    // Predicated region
    $region50: #{tpu_custom_call.1} parent=1 // pred_check
      _
    $region51: #{tpu_custom_call.1} parent=1 // pred_check_branch
      %94 = sbr.rel (0) target = $region53
    $region52: #{tpu_custom_call.1} parent=1 // pred_region
      %95 = dma.done [#allocation9], 4096
    $region53: #{tpu_custom_call.1} parent=1 // pred_fallthru
      _
    // Predicated region
    $region54: #{tpu_custom_call.1} parent=1 // pred_check
      _
    $region55: #{tpu_custom_call.1} parent=1 // pred_check_branch
      %97 = sbr.rel (0) target = $region57
    $region56: #{tpu_custom_call.1} parent=1 // pred_region
      %98 = dma.done [#allocation9], 2048
    $region57: #{tpu_custom_call.1} parent=1 // pred_fallthru
      _
    %v99 = vld [vmem:[#allocation2] sm:$0xff]
    %v100 = vld [vmem:[#allocation5] sm:$0xff]
    %v101 = vld [vmem:[#allocation5 + $0x8] sm:$0xff]
    %v102 = vld [vmem:[%s2] sm:$0x1]
    %v104 = vlaneseq
    %v105 = vshrl.u32 %v104, 7
    %v106 = vsub.s32 0, %v105
    %v107 = vrot.slane %v102, %v106
    %vm109 = vcmask 130048
    %v111 = vsel %vm109, %v99, 0
    %113 = vmatprep.subr.mxu0 0.0
    %114 = vmatpush1.msra.mxu0 %v100
    %115 = vmatprep.subr.mxu0 0.0
    %116 = vmatpush1.msra.mxu0 %v101
    %117 = vmatprep.subr.mxu0 0.0
    %118 = vmatpush1.msra.mxu0 0.0
    %119 = vmatprep.subr.mxu0 0.0
    %120 = vmatpush1.msra.mxu0 0.0
    %121 = vmatprep.subr.mxu0 0.0
    %122 = vmatpush1.msra.mxu0 0.0
    %123 = vmatprep.subr.mxu0 0.0
    %124 = vmatpush1.msra.mxu0 0.0
    %125 = vmatprep.subr.mxu0 0.0
    %126 = vmatpush1.msra.mxu0 0.0
    %127 = vmatprep.subr.mxu0 0.0
    %128 = vmatpush1.msra.mxu0 0.0
    %129 = vmatprep.subr.mxu0 0.0
    %130 = vmatpush1.msra.mxu0 0.0
    %131 = vmatprep.subr.mxu0 0.0
    %132 = vmatpush1.msra.mxu0 0.0
    %133 = vmatprep.subr.mxu0 0.0
    %134 = vmatpush1.msra.mxu0 0.0
    %135 = vmatprep.subr.mxu0 0.0
    %136 = vmatpush1.msra.mxu0 0.0
    %137 = vmatprep.subr.mxu0 0.0
    %138 = vmatpush1.msra.mxu0 0.0
    %139 = vmatprep.subr.mxu0 0.0
    %140 = vmatpush1.msra.mxu0 0.0
    %141 = vmatprep.subr.mxu0 0.0
    %142 = vmatpush1.msra.mxu0 0.0
    %143 = vmatprep.subr.mxu0 0.0
    %144 = vmatpush1.msra.mxu0 0.0
    %145 = vmatprep.subr.mxu0 0.0
    %146 = vmatpush1.msra.mxu0 0.0
    %147 = vmatprep.subr.mxu0 0.0
    %148 = vmatpush1.msra.mxu0 0.0
    %149 = vmatprep.subr.mxu0 0.0
    %150 = vmatpush1.msra.mxu0 0.0
    %151 = vmatprep.subr.mxu0 0.0
    %152 = vmatpush1.msra.mxu0 0.0
    %153 = vmatprep.subr.mxu0 0.0
    %154 = vmatpush1.msra.mxu0 0.0
    %155 = vmatprep.subr.mxu0 0.0
    %156 = vmatpush1.msra.mxu0 0.0
    %157 = vmatprep.subr.mxu0 0.0
    %158 = vmatpush1.msra.mxu0 0.0
    %159 = vmatprep.subr.mxu0 0.0
    %160 = vmatpush1.msra.mxu0 0.0
    %161 = vmatprep.subr.mxu0 0.0
    %162 = vmatpush1.msra.mxu0 0.0
    %163 = vmatprep.subr.mxu0 0.0
    %164 = vmatpush1.msra.mxu0 0.0
    %165 = vmatprep.subr.mxu0 0.0
    %166 = vmatpush1.msra.mxu0 0.0
    %167 = vmatprep.subr.mxu0 0.0
    %168 = vmatpush1.msra.mxu0 0.0
    %169 = vmatprep.subr.mxu0 0.0
    %170 = vmatpush1.msra.mxu0 0.0
    %171 = vmatprep.subr.mxu0 0.0
    %172 = vmatpush1.msra.mxu0 0.0
    %173 = vmatprep.subr.mxu0 0.0
    %174 = vmatpush1.msra.mxu0 0.0
    %175 = vmatprep.subr.mxu0 0.0
    %176 = vmatpush1.msra.mxu0 0.0
    %177 = vmatprep.mubr.f32.mxu0 0.0
    %178 = vmatmul.mubr.f32.gmra.mrb[0].mxu0 %v111
    %v179 = vpop.f32.mrb[0].mxu0
    %v180 = vadd.f32 %v107, %v179
    %v181 = vpop.f32.mrb[0].mxu0
    %182 = vdwg.mxu0
    %v183 = vtanh.pop %v180
    %v184 = vld [vmem:[#allocation7] sm:$0xff]
    %v185 = vld [vmem:[#allocation7 + $0x8] sm:$0xff]
    %v186 = vld [vmem:[#allocation7 + $0x10] sm:$0xff]
    %v187 = vld [vmem:[#allocation7 + $0x18] sm:$0xff]
    %v188 = vld [vmem:[#allocation7 + $0x20] sm:$0xff]
    %v189 = vld [vmem:[#allocation7 + $0x28] sm:$0xff]
    %v190 = vld [vmem:[#allocation7 + $0x30] sm:$0xff]
    %v191 = vld [vmem:[#allocation7 + $0x38] sm:$0xff]
    %v192 = vld [vmem:[#allocation7 + $0x40] sm:$0xff]
    %v193 = vld [vmem:[#allocation7 + $0x48] sm:$0xff]
    %v194 = vld [vmem:[#allocation7 + $0x50] sm:$0xff]
    %v195 = vld [vmem:[#allocation7 + $0x58] sm:$0xff]
    %v196 = vld [vmem:[#allocation7 + $0x60] sm:$0xff]
    %v197 = vld [vmem:[#allocation7 + $0x68] sm:$0xff]
    %v198 = vld [vmem:[#allocation7 + $0x70] sm:$0xff]
    %v199 = vld [vmem:[#allocation7 + $0x78] sm:$0xff]
    %v200 = vld [vmem:[#allocation7 + $0x80] sm:$0xff]
    %v201 = vld [vmem:[#allocation7 + $0x88] sm:$0xff]
    %v202 = vld [vmem:[#allocation7 + $0x90] sm:$0xff]
    %v203 = vld [vmem:[#allocation7 + $0x98] sm:$0xff]
    %v204 = vld [vmem:[#allocation7 + $0xa0] sm:$0xff]
    %v205 = vld [vmem:[#allocation7 + $0xa8] sm:$0xff]
    %v206 = vld [vmem:[#allocation7 + $0xb0] sm:$0xff]
    %v207 = vld [vmem:[#allocation7 + $0xb8] sm:$0xff]
    %v208 = vld [vmem:[#allocation7 + $0xc0] sm:$0xff]
    %v209 = vld [vmem:[#allocation7 + $0xc8] sm:$0xff]
    %v210 = vld [vmem:[#allocation7 + $0xd0] sm:$0xff]
    %v211 = vld [vmem:[#allocation7 + $0xd8] sm:$0xff]
    %v212 = vld [vmem:[#allocation7 + $0xe0] sm:$0xff]
    %v213 = vld [vmem:[#allocation7 + $0xe8] sm:$0xff]
    %v214 = vld [vmem:[#allocation7 + $0xf0] sm:$0xff]
    %v215 = vld [vmem:[#allocation7 + $0xf8] sm:$0xff]
    %v216 = vld [vmem:[%s4] sm:$0x3]
    %v218 = vlaneseq
    %v219 = vshrl.u32 %v218, 7
    %v220 = vsub.s32 0, %v219
    %v221 = vrot.slane %v216, %v220
    %v222 = vlaneseq
    %v223 = vshrl.u32 %v222, 7
    %v224 = vsub.s32 1, %v223
    %v225 = vrot.slane %v216, %v224
    %228 = vmatprep.subr.mxu0 %v185
    %229 = vmatpush1.msra.mxu0 %v184
    %230 = vmatprep.subr.mxu0 %v187
    %231 = vmatpush1.msra.mxu0 %v186
    %232 = vmatprep.subr.mxu0 %v189
    %233 = vmatpush1.msra.mxu0 %v188
    %234 = vmatprep.subr.mxu0 %v191
    %235 = vmatpush1.msra.mxu0 %v190
    %236 = vmatprep.subr.mxu0 %v193
    %237 = vmatpush1.msra.mxu0 %v192
    %238 = vmatprep.subr.mxu0 %v195
    %239 = vmatpush1.msra.mxu0 %v194
    %240 = vmatprep.subr.mxu0 %v197
    %241 = vmatpush1.msra.mxu0 %v196
    %242 = vmatprep.subr.mxu0 %v199
    %243 = vmatpush1.msra.mxu0 %v198
    %244 = vmatprep.subr.mxu0 %v201
    %245 = vmatpush1.msra.mxu0 %v200
    %246 = vmatprep.subr.mxu0 %v203
    %247 = vmatpush1.msra.mxu0 %v202
    %248 = vmatprep.subr.mxu0 %v205
    %249 = vmatpush1.msra.mxu0 %v204
    %250 = vmatprep.subr.mxu0 %v207
    %251 = vmatpush1.msra.mxu0 %v206
    %252 = vmatprep.subr.mxu0 %v209
    %253 = vmatpush1.msra.mxu0 %v208
    %254 = vmatprep.subr.mxu0 %v211
    %255 = vmatpush1.msra.mxu0 %v210
    %256 = vmatprep.subr.mxu0 %v213
    %257 = vmatpush1.msra.mxu0 %v212
    %258 = vmatprep.subr.mxu0 %v215
    %259 = vmatpush1.msra.mxu0 %v214
    %260 = vmatprep.subr.mxu0 0.0
    %261 = vmatpush1.msra.mxu0 0.0
    %262 = vmatprep.subr.mxu0 0.0
    %263 = vmatpush1.msra.mxu0 0.0
    %264 = vmatprep.subr.mxu0 0.0
    %265 = vmatpush1.msra.mxu0 0.0
    %266 = vmatprep.subr.mxu0 0.0
    %267 = vmatpush1.msra.mxu0 0.0
    %268 = vmatprep.subr.mxu0 0.0
    %269 = vmatpush1.msra.mxu0 0.0
    %270 = vmatprep.subr.mxu0 0.0
    %271 = vmatpush1.msra.mxu0 0.0
    %272 = vmatprep.subr.mxu0 0.0
    %273 = vmatpush1.msra.mxu0 0.0
    %274 = vmatprep.subr.mxu0 0.0
    %275 = vmatpush1.msra.mxu0 0.0
    %276 = vmatprep.subr.mxu0 0.0
    %277 = vmatpush1.msra.mxu0 0.0
    %278 = vmatprep.subr.mxu0 0.0
    %279 = vmatpush1.msra.mxu0 0.0
    %280 = vmatprep.subr.mxu0 0.0
    %281 = vmatpush1.msra.mxu0 0.0
    %282 = vmatprep.subr.mxu0 0.0
    %283 = vmatpush1.msra.mxu0 0.0
    %284 = vmatprep.subr.mxu0 0.0
    %285 = vmatpush1.msra.mxu0 0.0
    %286 = vmatprep.subr.mxu0 0.0
    %287 = vmatpush1.msra.mxu0 0.0
    %288 = vmatprep.subr.mxu0 0.0
    %289 = vmatpush1.msra.mxu0 0.0
    %290 = vmatprep.subr.mxu0 0.0
    %291 = vmatpush1.msra.mxu0 0.0
    %292 = vmatprep.mubr.f32.mxu0 0.0
    %293 = vmatmul.mubr.f32.gmra.mrb[0].mxu0 %v183
    %v294 = vpop.f32.mrb[0].mxu0
    %v295 = vadd.f32 %v221, %v294
    %v296 = vpop.f32.mrb[0].mxu0
    %v297 = vadd.f32 %v225, %v296
    %298 = vdwg.mxu0
    %v299 = vtanh.pop %v295
    %v300 = vtanh.pop %v297
    %v301 = vld [vmem:[#allocation8] sm:$0xff]
    %v302 = vld [vmem:[#allocation8 + $0x8] sm:$0xff]
    %v303 = vld [vmem:[#allocation8 + $0x10] sm:$0xff]
    %v304 = vld [vmem:[#allocation8 + $0x18] sm:$0xff]
    %v305 = vld [vmem:[#allocation8 + $0x20] sm:$0xff]
    %v306 = vld [vmem:[#allocation8 + $0x28] sm:$0xff]
    %v307 = vld [vmem:[#allocation8 + $0x30] sm:$0xff]
    %v308 = vld [vmem:[#allocation8 + $0x38] sm:$0xff]
    %v309 = vld [vmem:[#allocation8 + $0x40] sm:$0xff]
    %v310 = vld [vmem:[#allocation8 + $0x48] sm:$0xff]
    %v311 = vld [vmem:[#allocation8 + $0x50] sm:$0xff]
    %v312 = vld [vmem:[#allocation8 + $0x58] sm:$0xff]
    %v313 = vld [vmem:[#allocation8 + $0x60] sm:$0xff]
    %v314 = vld [vmem:[#allocation8 + $0x68] sm:$0xff]
    %v315 = vld [vmem:[#allocation8 + $0x70] sm:$0xff]
    %v316 = vld [vmem:[#allocation8 + $0x78] sm:$0xff]
    %v317 = vld [vmem:[#allocation8 + $0x80] sm:$0xff]
    %v318 = vld [vmem:[#allocation8 + $0x88] sm:$0xff]
    %v319 = vld [vmem:[#allocation8 + $0x90] sm:$0xff]
    %v320 = vld [vmem:[#allocation8 + $0x98] sm:$0xff]
    %v321 = vld [vmem:[#allocation8 + $0xa0] sm:$0xff]
    %v322 = vld [vmem:[#allocation8 + $0xa8] sm:$0xff]
    %v323 = vld [vmem:[#allocation8 + $0xb0] sm:$0xff]
    %v324 = vld [vmem:[#allocation8 + $0xb8] sm:$0xff]
    %v325 = vld [vmem:[#allocation8 + $0xc0] sm:$0xff]
    %v326 = vld [vmem:[#allocation8 + $0xc8] sm:$0xff]
    %v327 = vld [vmem:[#allocation8 + $0xd0] sm:$0xff]
    %v328 = vld [vmem:[#allocation8 + $0xd8] sm:$0xff]
    %v329 = vld [vmem:[#allocation8 + $0xe0] sm:$0xff]
    %v330 = vld [vmem:[#allocation8 + $0xe8] sm:$0xff]
    %v331 = vld [vmem:[#allocation8 + $0xf0] sm:$0xff]
    %v332 = vld [vmem:[#allocation8 + $0xf8] sm:$0xff]
    %v333 = vld [vmem:[%s6] sm:$0x1]
    %v335 = vlaneseq
    %v336 = vshrl.u32 %v335, 7
    %v337 = vsub.s32 0, %v336
    %v338 = vrot.slane %v333, %v337
    %340 = vmatprep.subr.mxu0 0.0
    %341 = vmatpush1.msra.mxu0 %v301
    %342 = vmatprep.subr.mxu0 0.0
    %343 = vmatpush1.msra.mxu0 %v302
    %344 = vmatprep.subr.mxu0 0.0
    %345 = vmatpush1.msra.mxu0 %v303
    %346 = vmatprep.subr.mxu0 0.0
    %347 = vmatpush1.msra.mxu0 %v304
    %348 = vmatprep.subr.mxu0 0.0
    %349 = vmatpush1.msra.mxu0 %v305
    %350 = vmatprep.subr.mxu0 0.0
    %351 = vmatpush1.msra.mxu0 %v306
    %352 = vmatprep.subr.mxu0 0.0
    %353 = vmatpush1.msra.mxu0 %v307
    %354 = vmatprep.subr.mxu0 0.0
    %355 = vmatpush1.msra.mxu0 %v308
    %356 = vmatprep.subr.mxu0 0.0
    %357 = vmatpush1.msra.mxu0 %v309
    %358 = vmatprep.subr.mxu0 0.0
    %359 = vmatpush1.msra.mxu0 %v310
    %360 = vmatprep.subr.mxu0 0.0
    %361 = vmatpush1.msra.mxu0 %v311
    %362 = vmatprep.subr.mxu0 0.0
    %363 = vmatpush1.msra.mxu0 %v312
    %364 = vmatprep.subr.mxu0 0.0
    %365 = vmatpush1.msra.mxu0 %v313
    %366 = vmatprep.subr.mxu0 0.0
    %367 = vmatpush1.msra.mxu0 %v314
    %368 = vmatprep.subr.mxu0 0.0
    %369 = vmatpush1.msra.mxu0 %v315
    %370 = vmatprep.subr.mxu0 0.0
    %371 = vmatpush1.msra.mxu0 %v316
    %372 = vmatprep.subr.mxu0 0.0
    %373 = vmatpush1.msra.mxu0 %v317
    %374 = vmatprep.subr.mxu0 0.0
    %375 = vmatpush1.msra.mxu0 %v318
    %376 = vmatprep.subr.mxu0 0.0
    %377 = vmatpush1.msra.mxu0 %v319
    %378 = vmatprep.subr.mxu0 0.0
    %379 = vmatpush1.msra.mxu0 %v320
    %380 = vmatprep.subr.mxu0 0.0
    %381 = vmatpush1.msra.mxu0 %v321
    %382 = vmatprep.subr.mxu0 0.0
    %383 = vmatpush1.msra.mxu0 %v322
    %384 = vmatprep.subr.mxu0 0.0
    %385 = vmatpush1.msra.mxu0 %v323
    %386 = vmatprep.subr.mxu0 0.0
    %387 = vmatpush1.msra.mxu0 %v324
    %388 = vmatprep.subr.mxu0 0.0
    %389 = vmatpush1.msra.mxu0 %v325
    %390 = vmatprep.subr.mxu0 0.0
    %391 = vmatpush1.msra.mxu0 %v326
    %392 = vmatprep.subr.mxu0 0.0
    %393 = vmatpush1.msra.mxu0 %v327
    %394 = vmatprep.subr.mxu0 0.0
    %395 = vmatpush1.msra.mxu0 %v328
    %396 = vmatprep.subr.mxu0 0.0
    %397 = vmatpush1.msra.mxu0 %v329
    %398 = vmatprep.subr.mxu0 0.0
    %399 = vmatpush1.msra.mxu0 %v330
    %400 = vmatprep.subr.mxu0 0.0
    %401 = vmatpush1.msra.mxu0 %v331
    %402 = vmatprep.subr.mxu0 0.0
    %403 = vmatpush1.msra.mxu0 %v332
    %404 = vmatprep.mubr.f32.mxu0 %v300
    %405 = vmatmul.mubr.f32.gmra.mrb[0].mxu0 %v299
    %v406 = vpop.f32.mrb[0].mxu0
    %v407 = vadd.f32 %v338, %v406
    %v408 = vpop.f32.mrb[0].mxu0
    %409 = vdwg.mxu0
    %v410 = vtanh.pop %v407
    %v411 = vld [vmem:[#allocation10] sm:$0xff]
    %v412 = vld [vmem:[#allocation10 + $0x8] sm:$0xff]
    %v413 = vld [vmem:[#allocation10 + $0x10] sm:$0xff]
    %v414 = vld [vmem:[#allocation10 + $0x18] sm:$0xff]
    %v415 = vld [vmem:[#allocation10 + $0x20] sm:$0xff]
    %v416 = vld [vmem:[#allocation10 + $0x28] sm:$0xff]
    %v417 = vld [vmem:[#allocation10 + $0x30] sm:$0xff]
    %v418 = vld [vmem:[#allocation10 + $0x38] sm:$0xff]
    %v419 = vld [vmem:[#allocation10 + $0x40] sm:$0xff]
    %v420 = vld [vmem:[#allocation10 + $0x48] sm:$0xff]
    %v421 = vld [vmem:[#allocation10 + $0x50] sm:$0xff]
    %v422 = vld [vmem:[#allocation10 + $0x58] sm:$0xff]
    %v423 = vld [vmem:[#allocation10 + $0x60] sm:$0xff]
    %v424 = vld [vmem:[#allocation10 + $0x68] sm:$0xff]
    %v425 = vld [vmem:[#allocation10 + $0x70] sm:$0xff]
    %v426 = vld [vmem:[#allocation10 + $0x78] sm:$0xff]
    %v427 = vld [vmem:[%s8] sm:$0x1]
    %v429 = vlaneseq
    %v430 = vshrl.u32 %v429, 7
    %v431 = vsub.s32 0, %v430
    %v432 = vrot.slane %v427, %v431
    %434 = vmatprep.subr.mxu0 0.0
    %435 = vmatpush1.msra.mxu0 %v411
    %436 = vmatprep.subr.mxu0 0.0
    %437 = vmatpush1.msra.mxu0 %v412
    %438 = vmatprep.subr.mxu0 0.0
    %439 = vmatpush1.msra.mxu0 %v413
    %440 = vmatprep.subr.mxu0 0.0
    %441 = vmatpush1.msra.mxu0 %v414
    %442 = vmatprep.subr.mxu0 0.0
    %443 = vmatpush1.msra.mxu0 %v415
    %444 = vmatprep.subr.mxu0 0.0
    %445 = vmatpush1.msra.mxu0 %v416
    %446 = vmatprep.subr.mxu0 0.0
    %447 = vmatpush1.msra.mxu0 %v417
    %448 = vmatprep.subr.mxu0 0.0
    %449 = vmatpush1.msra.mxu0 %v418
    %450 = vmatprep.subr.mxu0 0.0
    %451 = vmatpush1.msra.mxu0 %v419
    %452 = vmatprep.subr.mxu0 0.0
    %453 = vmatpush1.msra.mxu0 %v420
    %454 = vmatprep.subr.mxu0 0.0
    %455 = vmatpush1.msra.mxu0 %v421
    %456 = vmatprep.subr.mxu0 0.0
    %457 = vmatpush1.msra.mxu0 %v422
    %458 = vmatprep.subr.mxu0 0.0
    %459 = vmatpush1.msra.mxu0 %v423
    %460 = vmatprep.subr.mxu0 0.0
    %461 = vmatpush1.msra.mxu0 %v424
    %462 = vmatprep.subr.mxu0 0.0
    %463 = vmatpush1.msra.mxu0 %v425
    %464 = vmatprep.subr.mxu0 0.0
    %465 = vmatpush1.msra.mxu0 %v426
    %466 = vmatprep.subr.mxu0 0.0
    %467 = vmatpush1.msra.mxu0 0.0
    %468 = vmatprep.subr.mxu0 0.0
    %469 = vmatpush1.msra.mxu0 0.0
    %470 = vmatprep.subr.mxu0 0.0
    %471 = vmatpush1.msra.mxu0 0.0
    %472 = vmatprep.subr.mxu0 0.0
    %473 = vmatpush1.msra.mxu0 0.0
    %474 = vmatprep.subr.mxu0 0.0
    %475 = vmatpush1.msra.mxu0 0.0
    %476 = vmatprep.subr.mxu0 0.0
    %477 = vmatpush1.msra.mxu0 0.0
    %478 = vmatprep.subr.mxu0 0.0
    %479 = vmatpush1.msra.mxu0 0.0
    %480 = vmatprep.subr.mxu0 0.0
    %481 = vmatpush1.msra.mxu0 0.0
    %482 = vmatprep.subr.mxu0 0.0
    %483 = vmatpush1.msra.mxu0 0.0
    %484 = vmatprep.subr.mxu0 0.0
    %485 = vmatpush1.msra.mxu0 0.0
    %486 = vmatprep.subr.mxu0 0.0
    %487 = vmatpush1.msra.mxu0 0.0
    %488 = vmatprep.subr.mxu0 0.0
    %489 = vmatpush1.msra.mxu0 0.0
    %490 = vmatprep.subr.mxu0 0.0
    %491 = vmatpush1.msra.mxu0 0.0
    %492 = vmatprep.subr.mxu0 0.0
    %493 = vmatpush1.msra.mxu0 0.0
    %494 = vmatprep.subr.mxu0 0.0
    %495 = vmatpush1.msra.mxu0 0.0
    %496 = vmatprep.subr.mxu0 0.0
    %497 = vmatpush1.msra.mxu0 0.0
    %498 = vmatprep.mubr.f32.mxu0 0.0
    %499 = vmatmul.mubr.f32.gmra.mrb[0].mxu0 %v410
    %v500 = vpop.f32.mrb[0].mxu0
    %v501 = vadd.f32 %v432, %v500
    %v502 = vpop.f32.mrb[0].mxu0
    %503 = vdwg.mxu0
    %504 = vst [vmem:[#allocation11] sm:$0xff] %v501
    // Predicated region
    $region58: #{tpu_custom_call.1} parent=1 // pred_check
      _
    $region59: #{tpu_custom_call.1} parent=1 // pred_check_branch
      %506 = sbr.rel (0) target = $region61
    $region60: #{tpu_custom_call.1} parent=1 // pred_region
      %s508 = ssub.s32 128, 128
      %509 = vsyncadd [#allocation4], %s508
      %s511 = sshll.u32 [#allocation11], 4
      %s512 = int_to_ptr.vmem [resolvable:$true] %s511
      %514 = dma.vmem_to_hbm [thread:$0]  %s512, 128, %s9, [#allocation4]
    $region61: #{tpu_custom_call.1} parent=1 // pred_fallthru
      _
    // Predicated region
    $region62: #{tpu_custom_call.1} parent=1 // pred_check
      _
    $region63: #{tpu_custom_call.1} parent=1 // pred_check_branch
      %516 = sbr.rel (0) target = $region65
    $region64: #{tpu_custom_call.1} parent=1 // pred_region
      %517 = dma.done [#allocation4], 128
    $region65: #{tpu_custom_call.1} parent=1 // pred_fallthru
      _
    %518 = vsyncpa [#allocation3], 1
    %519 = vsyncpa [#allocation6], 1
    %520 = vsyncpa [#allocation9], 1
    %521 = vsyncpa [#allocation4], 1

</llo_original>
